<compile_context>
chip_gen: v5e
topology: v5e:2x2
jax: 0.10.0
libtpu: 0.0.40
codegen_flags: <defaults>
</compile_context>

<pallas_src>
import jax
import jax.numpy as jnp
from jax.experimental import pallas as pl
from jax.experimental.pallas import tpu as pltpu

# ---- synthetic model dims ----
PATCH = 8
D_MODEL = 128            # embed dim (lane friendly)
EXPAND = 2
D_INNER = EXPAND * D_MODEL   # 256
D_STATE = 8
DT_RANK = 8
D_CONV = 4
DEPTH = 2
EPS = 1e-5
CHUNK = 32               # time-chunk for the selective scan (power of 2)
BC_PAD = 128             # B|C slab padded to a full 128-lane width (dense stores)
SCAN_LEVELS = [1 << i for i in range(CHUNK.bit_length() - 1)]   # [1,2,4,8,16]


def _silu(v):
    # reciprocal on the EUP slot (approx) instead of a VALU Newton sequence
    return v * pl.reciprocal(1.0 + jnp.exp(-v), approx=True)


def _softplus(v):
    return jnp.maximum(v, 0.0) + jnp.log(1.0 + jnp.exp(-jnp.abs(v)))


# ----------------------------------------------------------------------------
# Patch embedding: Conv3d(C, D, kernel=(1,p,p), stride=(1,p,p)) == matmul over
# im2col'ed per-frame patches.  Tiled over rows, bf16 in / bf16 MXU / f32 acc.
# ----------------------------------------------------------------------------
def _patch_embed_kernel(p_ref, w_ref, b_ref, o_ref):
    o_ref[...] = (jnp.dot(p_ref[...], w_ref[...],
                          preferred_element_type=jnp.float32)
                  + b_ref[...])


def patch_embed(patches, w, b):
    m, kdim = patches.shape
    tile_m = m
    for cand in (1024, 512, 256, 128, 64, 32, 16, 8):
        if m % cand == 0:
            tile_m = cand
            break
    return pl.pallas_call(
        _patch_embed_kernel,
        out_shape=jax.ShapeDtypeStruct((m, D_MODEL), jnp.float32),
        grid=(m // tile_m,),
        in_specs=[pl.BlockSpec((tile_m, kdim), lambda i: (i, 0)),
                  pl.BlockSpec((kdim, D_MODEL), lambda i: (0, 0)),
                  pl.BlockSpec((1, D_MODEL), lambda i: (0, 0))],
        out_specs=pl.BlockSpec((tile_m, D_MODEL), lambda i: (i, 0)),
        compiler_params=pltpu.CompilerParams(
            dimension_semantics=("parallel",)),
    )(patches, w, b)


# ----------------------------------------------------------------------------
# Full Mamba stack: grid = (batch,).  Weights are resident in VMEM (constant
# index maps), the depth loop runs inside the kernel, the hidden state lives in
# a VMEM scratch across all depths, final RMSNorm + cls pooling is fused in.
# ----------------------------------------------------------------------------
def _mamba_stack_kernel(hid_ref, nw_ref, win_ref, convw_ref, convb_ref,
                        wproj_ref, bdt_ref, alog_ref, dpar_ref, wout_ref,
                        fnorm_ref,
                        out_ref,
                        h_scr, dt_scr, xa_scr, bc_scr, z_scr, y_scr):
    L, D = h_scr.shape
    E = xa_scr.shape[1]
    N = alog_ref.shape[1]
    K = convw_ref.shape[1]
    depth = nw_ref.shape[0]

    # Hoisted iotas (JAX does not CSE broadcast_in_dim; build them once).
    row_iota = jax.lax.broadcasted_iota(jnp.int32, (L, E), 0)
    chunk_iota = jax.lax.broadcasted_iota(jnp.int32, (CHUNK, E), 0)

    # Load this batch element's tokens once; hidden state stays VMEM resident.
    h_scr[...] = hid_ref[0]

    for d in range(depth):
        x = h_scr[...]                                         # (L, D) f32

        # ---- RMSNorm (f32) ----
        var = jnp.mean(x * x, axis=-1, keepdims=True)
        xn = x * jax.lax.rsqrt(var + EPS) * nw_ref[d]

        # ---- in_proj: one bf16 MXU matmul -> (L, 2E), split SSM / gate ----
        xz = jnp.dot(xn.astype(jnp.bfloat16), win_ref[d],
                     preferred_element_type=jnp.float32)
        xm = xz[:, :E]
        z_scr[...] = _silu(xz[:, E:])        # pre-activated gate, sliced per chunk

        # ---- causal depthwise conv1d: XLU sublane rolls + first-rows mask ----
        conv = xm * convw_ref[d, K - 1, :] + convb_ref[d]
        for sft in range(1, K):
            rolled = pltpu.roll(xm, shift=sft, axis=0)
            rolled = jnp.where(row_iota < sft, 0.0, rolled)
            conv = conv + rolled * convw_ref[d, K - 1 - sft, :]
        xm_act = _silu(conv)                                   # (L, E)
        xa_scr[...] = xm_act

        # ---- fused dt | B | C projection: single bf16 MXU pass, dense stores ----
        proj = jnp.dot(xm_act.astype(jnp.bfloat16), wproj_ref[d],
                       preferred_element_type=jnp.float32)     # (L, E + 128)
        dt_scr[...] = _softplus(proj[:, :E] + bdt_ref[d])
        bc_scr[...] = proj[:, E:]                              # (L, 128) dense

        neg_a = -jnp.exp(alog_ref[d])                          # (N, E)
        d_skip = dpar_ref[d]                                   # (1, E)

        # ---- chunked selective scan ----
        # Within each CHUNK-long time block the recurrence h[t]=da[t]*h[t-1]+dbx[t]
        # is evaluated with a Hillis-Steele parallel prefix on dense (CHUNK, E)
        # tiles (shifts via pltpu.roll on the XLU); only the block-boundary state
        # is carried between chunks.  D-skip + gating are folded into the store.
        def chunk_step(ci, carry):
            base = pl.multiple_of(ci * CHUNK, CHUNK)
            dt_c = dt_scr[pl.ds(base, CHUNK), :]               # (CHUNK, E)
            xa_c = xa_scr[pl.ds(base, CHUNK), :]               # (CHUNK, E)
            bc_c = bc_scr[pl.ds(base, CHUNK), :]               # (CHUNK, 128)
            dtx_c = dt_c * xa_c
            level_masks = [chunk_iota < s for s in SCAN_LEVELS]  # hoisted over n
            y_c = jnp.zeros((CHUNK, E), jnp.float32)
            new_carry = []
            for n in range(N):
                av = jnp.exp(dt_c * neg_a[n:n + 1, :])         # da   (CHUNK, E)
                bv = dtx_c * bc_c[:, n:n + 1]                  # dbx  (CHUNK, E)
                for li, s in enumerate(SCAN_LEVELS):           # log2(CHUNK) levels
                    m = level_masks[li]
                    av_r = pltpu.roll(av, shift=s, axis=0)
                    bv_r = pltpu.roll(bv, shift=s, axis=0)
                    bv = jnp.where(m, bv, av * bv_r + bv)
                    av = jnp.where(m, av, av * av_r)
                h_n = av * carry[n] + bv                       # (CHUNK, E)
                y_c = y_c + h_n * bc_c[:, N + n:N + n + 1]
                new_carry.append(h_n[CHUNK - 1:CHUNK, :])
            # D-skip + SiLU(z) gating fused into the dense chunk store.
            z_c = z_scr[pl.ds(base, CHUNK), :]
            y_scr[pl.ds(base, CHUNK), :] = (y_c + d_skip * xa_c) * z_c
            return tuple(new_carry)

        h0 = tuple(jnp.zeros((1, E), jnp.float32) for _ in range(N))
        jax.lax.fori_loop(0, L // CHUNK, chunk_step, h0)

        # ---- out_proj (bf16) + residual (hidden re-read, nothing kept live) ----
        out = jnp.dot(y_scr[...].astype(jnp.bfloat16), wout_ref[d],
                      preferred_element_type=jnp.float32)      # (L, D)
        h_scr[...] = h_scr[...] + out

    # ---- final RMSNorm + cls-token pooling ----
    cls = h_scr[0:1, :]
    v = jnp.mean(cls * cls, axis=-1, keepdims=True)
    out_ref[0] = cls * jax.lax.rsqrt(v + EPS) * fnorm_ref[...]


def mamba_stack(hidden, stack, final_norm_w):
    B, L, D = hidden.shape
    E, N, K = D_INNER, D_STATE, D_CONV
    depth = stack["w_in"].shape[0]
    assert L % CHUNK == 0

    def wspec(shape):
        # full depth-stacked weight block, resident (constant index map)
        return pl.BlockSpec((depth,) + shape, lambda b: (0, 0, 0))

    in_specs = [
        pl.BlockSpec((1, L, D), lambda b: (b, 0, 0)),  # hidden tokens
        wspec((1, D)),            # RMSNorm weight
        wspec((D, 2 * E)),        # in_proj (bf16)
        wspec((K, E)),            # conv1d weight (tap-major)
        wspec((1, E)),            # conv1d bias
        wspec((E, E + BC_PAD)),   # fused [dt | B | C | pad] projection (bf16)
        wspec((1, E)),            # dt bias
        wspec((N, E)),            # A_log
        wspec((1, E)),            # D skip param
        wspec((E, D)),            # out_proj (bf16)
        pl.BlockSpec((1, D), lambda b: (0, 0)),        # final norm weight
    ]
    out_spec = pl.BlockSpec((1, 1, D), lambda b: (b, 0, 0))
    scratch = [
        pltpu.VMEM((L, D), jnp.float32),        # resident hidden state
        pltpu.VMEM((L, E), jnp.float32),        # dt (post-softplus)
        pltpu.VMEM((L, E), jnp.float32),        # xm_act (post-conv, post-SiLU)
        pltpu.VMEM((L, BC_PAD), jnp.float32),   # B | C slab (lane-padded dense)
        pltpu.VMEM((L, E), jnp.float32),        # SiLU(z) gate
        pltpu.VMEM((L, E), jnp.float32),        # gated scan output y
    ]
    pooled = pl.pallas_call(
        _mamba_stack_kernel,
        out_shape=jax.ShapeDtypeStruct((B, 1, D), jnp.float32),
        grid=(B,),
        in_specs=in_specs,
        out_specs=out_spec,
        scratch_shapes=scratch,
        compiler_params=pltpu.CompilerParams(
            dimension_semantics=("parallel",)),
    )(hidden, stack["norm_w"], stack["w_in"], stack["conv_w"], stack["conv_b"],
      stack["w_proj"], stack["b_dt"], stack["a_log"], stack["d_skip"],
      stack["w_out"], final_norm_w)
    return pooled[:, 0, :]


# ----------------------------------------------------------------------------
# Parameters (deterministic synthetic init, depth-stacked / pre-fused) and
# full forward pass
# ----------------------------------------------------------------------------
def init_params(key, C, T, nsp):
    keys = list(jax.random.split(key, 64))
    kit = iter(keys)

    def nrm(shape, scale=0.02):
        return (scale * jax.random.normal(next(kit), shape)).astype(jnp.float32)

    params = {
        "patch_w": nrm((C * PATCH * PATCH, D_MODEL)).astype(jnp.bfloat16),
        "patch_b": jnp.zeros((1, D_MODEL), jnp.float32),
        "cls": nrm((1, 1, D_MODEL)),
        "pos": nrm((1, 1 + nsp, D_MODEL)),
        "tpos": nrm((1, T, D_MODEL)),
        "final_norm_w": jnp.ones((1, D_MODEL), jnp.float32),
    }

    norm_w, w_in, conv_w, conv_b = [], [], [], []
    w_proj, b_dt, a_log, d_skip, w_out = [], [], [], [], []
    for _ in range(DEPTH):
        wx_dt = nrm((D_INNER, DT_RANK))
        wx_b = nrm((D_INNER, D_STATE))
        wx_c = nrm((D_INNER, D_STATE))
        w_dt = nrm((DT_RANK, D_INNER))
        norm_w.append(jnp.ones((1, D_MODEL), jnp.float32))
        w_in.append(nrm((D_MODEL, 2 * D_INNER)))
        # conv_w is tap-major (K, E); real Conv1d checkpoints (E,1,K) must be
        # transposed on load.
        conv_w.append(nrm((D_CONV, D_INNER), 0.1))
        conv_b.append(jnp.zeros((1, D_INNER), jnp.float32))
        # fused projection: [ folded dt (E,E) | B (E,N) | C (E,N) | zero pad ]
        w_proj.append(jnp.concatenate(
            [wx_dt @ w_dt, wx_b, wx_c,
             jnp.zeros((D_INNER, BC_PAD - 2 * D_STATE), jnp.float32)], axis=1))
        b_dt.append(jnp.full((1, D_INNER), -4.6, jnp.float32))
        a_log.append(jnp.log(jnp.broadcast_to(
            jnp.arange(1, D_STATE + 1, dtype=jnp.float32)[:, None],
            (D_STATE, D_INNER))))
        d_skip.append(jnp.ones((1, D_INNER), jnp.float32))
        w_out.append(nrm((D_INNER, D_MODEL)))

    params["stack"] = {
        "norm_w": jnp.stack(norm_w),
        "w_in": jnp.stack(w_in).astype(jnp.bfloat16),
        "conv_w": jnp.stack(conv_w),
        "conv_b": jnp.stack(conv_b),
        "w_proj": jnp.stack(w_proj).astype(jnp.bfloat16),
        "b_dt": jnp.stack(b_dt),
        "a_log": jnp.stack(a_log),
        "d_skip": jnp.stack(d_skip),
        "w_out": jnp.stack(w_out).astype(jnp.bfloat16),
    }
    return params


def videomamba_encoder_forward(x, params):
    """x: (B, C, T, H, W) float32 (NCTHW).  Returns pooled embeds (B, D_MODEL)."""
    B, C, T, H, W = x.shape
    nh, nw = H // PATCH, W // PATCH
    nsp = nh * nw

    # --- patch embedding (Conv3d kernel (1,p,p)) as tiled Pallas matmul ---
    xp = x.reshape(B, C, T, nh, PATCH, nw, PATCH)
    xp = xp.transpose(0, 2, 3, 5, 1, 4, 6).reshape(
        B * T * nsp, C * PATCH * PATCH).astype(jnp.bfloat16)   # bf16 input slab
    tok = patch_embed(xp, params["patch_w"], params["patch_b"])
    tok = tok.reshape(B, T, nsp, D_MODEL)

    # --- cls token + spatial pos embed + temporal pos embed (glue) ---
    tok = (tok
           + params["pos"][0, 1:][None, None, :, :]
           + params["tpos"][0][None, :, None, :])
    cls = jnp.broadcast_to(params["cls"] + params["pos"][:, :1],
                           (B, 1, D_MODEL))
    hidden = jnp.concatenate(
        [cls, tok.reshape(B, T * nsp, D_MODEL)], axis=1)        # (B, L0, D)

    # Pad the sequence to a multiple of CHUNK (sublane alignment).  The scan is
    # causal and pooling uses the cls token (row 0), so end-padding is inert.
    L0 = 1 + T * nsp
    L = ((L0 + CHUNK - 1) // CHUNK) * CHUNK
    if L != L0:
        hidden = jnp.pad(hidden, ((0, 0), (0, L - L0), (0, 0)))

    # --- full Mamba stack + final norm + cls pooling in one Pallas kernel ---
    return mamba_stack(hidden, params["stack"], params["final_norm_w"])


if __name__ == "__main__":
    key = jax.random.PRNGKey(0)
    kx, kp = jax.random.split(key)
    B, C, T, H, W = 2, 3, 4, 16, 16
    x = jax.random.normal(kx, (B, C, T, H, W), dtype=jnp.float32)
    params = init_params(kp, C, T, (H // PATCH) * (W // PATCH))

    pooled = videomamba_encoder_forward(x, params)
    pooled = jax.block_until_ready(pooled)
    assert pooled.shape == (B, D_MODEL), pooled.shape
    assert bool(jnp.all(jnp.isfinite(pooled)))
    print("KERNEL_OK")
</pallas_src>

<mosaic_0001>
module attributes {stable_mosaic.version = 11 : i64} {
  func.func @_patch_embed_kernel(%arg0: i32, %arg1: memref<32x192xbf16, #tpu.memory_space<vmem>>, %arg2: memref<192x128xbf16, #tpu.memory_space<vmem>>, %arg3: memref<1x128xf32, #tpu.memory_space<vmem>>, %arg4: memref<32x128xf32, #tpu.memory_space<vmem>>) attributes {dimension_semantics = [#tpu.dimension_semantics<parallel>], iteration_bounds = array<i64: 1>, scalar_prefetch = 0 : i64, scratch_operands = 0 : i64, tpu.core_type = #tpu.core_type<tc>, window_params = [{transform_indices = @transform_0, window_bounds = array<i64: 32, 192>}, {pipeline_mode = #tpu.pipeline_mode<synchronous>, transform_indices = @transform_1, window_bounds = array<i64: 192, 128>}, {pipeline_mode = #tpu.pipeline_mode<synchronous>, transform_indices = @transform_2, window_bounds = array<i64: 1, 128>}, {transform_indices = @transform_3, window_bounds = array<i64: 32, 128>}]} {
    %c0 = arith.constant 0 : index
    %c0_0 = arith.constant 0 : index
    %0 = vector.load %arg1[%c0, %c0_0] : memref<32x192xbf16, #tpu.memory_space<vmem>>, vector<32x192xbf16>
    %c0_1 = arith.constant 0 : index
    %c0_2 = arith.constant 0 : index
    %1 = vector.load %arg2[%c0_1, %c0_2] : memref<192x128xbf16, #tpu.memory_space<vmem>>, vector<192x128xbf16>
    %cst = arith.constant dense<0.000000e+00> : vector<32x128xf32>
    %2 = tpu.matmul %0, %1, %cst {dimension_numbers = #tpu.dot_dimension_numbers<[1], [0], [0], [1], [0, 0, 1, 1], [], []>} : vector<32x192xbf16>, vector<192x128xbf16>, vector<32x128xf32> -> vector<32x128xf32>
    %c0_3 = arith.constant 0 : index
    %c0_4 = arith.constant 0 : index
    %3 = vector.load %arg3[%c0_3, %c0_4] : memref<1x128xf32, #tpu.memory_space<vmem>>, vector<1x128xf32>
    %4 = vector.broadcast %3 : vector<1x128xf32> to vector<32x128xf32>
    %5 = arith.addf %2, %4 : vector<32x128xf32>
    %c0_5 = arith.constant 0 : index
    %c0_6 = arith.constant 0 : index
    %6 = vector.load %arg4[%c0_5, %c0_6] : memref<32x128xf32, #tpu.memory_space<vmem>>, vector<32x128xf32>
    tpu.vector_store %arg4[%c0_5, %c0_6], %5 {strides = array<i32>} : memref<32x128xf32, #tpu.memory_space<vmem>>, vector<32x128xf32>,
    return
  }
  func.func @transform_0(%arg0: i32) -> (i32, i32) {
    %c0_i32 = arith.constant 0 : i32
    %c0_i32_0 = arith.constant 0 : i32
    return %arg0, %c0_i32 : i32, i32
  }
  func.func @transform_1(%arg0: i32) -> (i32, i32) {
    %c0_i32 = arith.constant 0 : i32
    %c0_i32_0 = arith.constant 0 : i32
    %c0_i32_1 = arith.constant 0 : i32
    return %c0_i32, %c0_i32_0 : i32, i32
  }
  func.func @transform_2(%arg0: i32) -> (i32, i32) {
    %c0_i32 = arith.constant 0 : i32
    %c0_i32_0 = arith.constant 0 : i32
    %c0_i32_1 = arith.constant 0 : i32
    return %c0_i32, %c0_i32_0 : i32, i32
  }
  func.func @transform_3(%arg0: i32) -> (i32, i32) {
    %c0_i32 = arith.constant 0 : i32
    %c0_i32_0 = arith.constant 0 : i32
    return %arg0, %c0_i32 : i32, i32
  }
}

</mosaic_0001>

<llo_original>
// kernel: tpu_custom_call.1
$region0: #{tpu_custom_call.1}
  #allocation0 [shape = 'u32[]', space=smem, size = 0x4, offset = 0x4, fixed_abs, tag = 'smem constant byte address 0x4 - core index']
  #allocation1 [shape = 'u32[72,128]{1,0:T(1,128)}', space=vmem, size = 0x9000, scoped, tag = 'internal scratch']
  %s0 = inlined_call_operand.hbm [shape: bf16[32,192], index: 0, kind: input, shape index: {}]
  %s1 = inlined_call_operand.hbm [shape: bf16[192,128], index: 1, kind: input, shape index: {}]
  %s2 = inlined_call_operand.vmem [shape: f32[1,128], index: 2, kind: input, shape index: {}]
  %s3 = inlined_call_operand.hbm [shape: f32[32,128], index: 3, kind: output, shape index: {}]
  %s4 = sld [smem:[#allocation0]]
  $region30: #{tpu_custom_call.1} parent=0
    _
  %s6 = ssub.s32 1, %s4
  %s7 = scalar_select 0, %s6, %s4
  $region1: #{tpu_custom_call.1} parent=0
    #allocation2 [shape = 'u8[16384]{0}', space=vmem, size = 0x4000, scoped, tag = 'input window, operand 0, single buffered']
    #allocation3 [shape = 's32[1]{0}', space=sflag, size = 0x4, scoped, tag = 'scoped memory for tpu_custom_call.1']
    #allocation4 [shape = 's32[1]{0}', space=sflag, size = 0x4, scoped, tag = 'scoped memory for tpu_custom_call.1']
    #allocation5 [shape = 'u8[49152]{0}', space=vmem, size = 0xc000, scoped, tag = 'input window, operand 1, single buffered']
    #allocation6 [shape = 's32[1]{0}', space=sflag, size = 0x4, scoped, tag = 'scoped memory for tpu_custom_call.1']
    #allocation7 [shape = 'u8[16384]{0}', space=vmem, size = 0x4000, scoped, tag = 'output window, operand 0, single buffered']
    %8 = vsyncpa [#allocation3], 0
    %9 = vsyncpa [#allocation6], 0
    %10 = vsyncpa [#allocation4], 0
    // Predicated region
    $region2: #{tpu_custom_call.1} parent=1 // pred_check
      _
    $region3: #{tpu_custom_call.1} parent=1 // pred_check_branch
      %12 = sbr.rel (0) target = $region5
    $region4: #{tpu_custom_call.1} parent=1 // pred_region
      %14 = vsyncadd [#allocation3], 0
      %s15 = sshll.u32 %s0, 4
      %s16 = int_to_ptr.hbm [resolvable:$true] %s15
      %s17 = sshll.u32 [#allocation2], 4
      %s18 = int_to_ptr.vmem [resolvable:$true] %s17
      %23 = dma.hbm_to_vmem [thread:$0]  %s16, 512, %s18, [#allocation3], 128, 128, 8
    $region5: #{tpu_custom_call.1} parent=1 // pred_fallthru
      _
    // Predicated region
    $region6: #{tpu_custom_call.1} parent=1 // pred_check
      _
    $region7: #{tpu_custom_call.1} parent=1 // pred_check_branch
      %25 = sbr.rel (0) target = $region9
    $region8: #{tpu_custom_call.1} parent=1 // pred_region
      %27 = vsyncadd [#allocation6], 0
      %s28 = sshll.u32 %s1, 4
      %s29 = int_to_ptr.hbm [resolvable:$true] %s28
      %s30 = sshll.u32 [#allocation5], 4
      %s31 = int_to_ptr.vmem [resolvable:$true] %s30
      %36 = dma.hbm_to_vmem [thread:$0]  %s29, 1536, %s31, [#allocation6], 64, 64, 4
    $region9: #{tpu_custom_call.1} parent=1 // pred_fallthru
      _
    // Predicated region
    $region10: #{tpu_custom_call.1} parent=1 // pred_check
      _
    $region11: #{tpu_custom_call.1} parent=1 // pred_check_branch
      %38 = sbr.rel (0) target = $region13
    $region12: #{tpu_custom_call.1} parent=1 // pred_region
      _
    $region13: #{tpu_custom_call.1} parent=1 // pred_fallthru
      _
    // Predicated region
    $region14: #{tpu_custom_call.1} parent=1 // pred_check
      _
    $region15: #{tpu_custom_call.1} parent=1 // pred_check_branch
      %40 = sbr.rel (0) target = $region17
    $region16: #{tpu_custom_call.1} parent=1 // pred_region
      %42 = dma.done [#allocation3], 512
    $region17: #{tpu_custom_call.1} parent=1 // pred_fallthru
      _
    // Predicated region
    $region18: #{tpu_custom_call.1} parent=1 // pred_check
      _
    $region19: #{tpu_custom_call.1} parent=1 // pred_check_branch
      %44 = sbr.rel (0) target = $region21
    $region20: #{tpu_custom_call.1} parent=1 // pred_region
      %46 = dma.done [#allocation6], 1536
    $region21: #{tpu_custom_call.1} parent=1 // pred_fallthru
      _
    %v48 = vld [vmem:[#allocation2] sm:$0xff]
    %v49 = vld [vmem:[#allocation2 + $0x8] sm:$0xff]
    %v50 = vld [vmem:[#allocation2 + $0x10] sm:$0xff]
    %v51 = vld [vmem:[#allocation2 + $0x18] sm:$0xff]
    %v52 = vld [vmem:[#allocation5] sm:$0xf]
    %v53 = vld [vmem:[#allocation5 + $0x4] sm:$0xf]
    %v54 = vld [vmem:[#allocation5 + $0x8] sm:$0xf]
    %v55 = vld [vmem:[#allocation5 + $0xc] sm:$0xf]
    %v56 = vld [vmem:[#allocation5 + $0x10] sm:$0xf]
    %v57 = vld [vmem:[#allocation5 + $0x14] sm:$0xf]
    %v58 = vld [vmem:[#allocation5 + $0x18] sm:$0xf]
    %v59 = vld [vmem:[#allocation5 + $0x1c] sm:$0xf]
    %v60 = vld [vmem:[#allocation5 + $0x20] sm:$0xf]
    %v61 = vld [vmem:[#allocation5 + $0x24] sm:$0xf]
    %v62 = vld [vmem:[#allocation5 + $0x28] sm:$0xf]
    %v63 = vld [vmem:[#allocation5 + $0x2c] sm:$0xf]
    %v64 = vld [vmem:[#allocation5 + $0x30] sm:$0xf]
    %v65 = vld [vmem:[#allocation5 + $0x34] sm:$0xf]
    %v66 = vld [vmem:[#allocation5 + $0x38] sm:$0xf]
    %v67 = vld [vmem:[#allocation5 + $0x3c] sm:$0xf]
    %v68 = vld [vmem:[#allocation5 + $0x40] sm:$0xf]
    %v69 = vld [vmem:[#allocation5 + $0x44] sm:$0xf]
    %v70 = vld [vmem:[#allocation5 + $0x48] sm:$0xf]
    %v71 = vld [vmem:[#allocation5 + $0x4c] sm:$0xf]
    %v72 = vld [vmem:[#allocation5 + $0x50] sm:$0xf]
    %v73 = vld [vmem:[#allocation5 + $0x54] sm:$0xf]
    %v74 = vld [vmem:[#allocation5 + $0x58] sm:$0xf]
    %v75 = vld [vmem:[#allocation5 + $0x5c] sm:$0xf]
    %v76 = vld [vmem:[%s2] sm:$0x1]
    %v78 = vperm.slane %v76, 0
    %v84 = vunpack.c.l.b16 %v48
    %v85 = vunpack.c.h.b16 %v48
    %v86 = vunpack.c.l.b16 %v49
    %v87 = vunpack.c.h.b16 %v49
    %v88 = vunpack.c.l.b16 %v50
    %v89 = vunpack.c.h.b16 %v50
    %v90 = vunpack.c.l.b16 %v51
    %v91 = vunpack.c.h.b16 %v51
    %v92 = vpack.c.b16 %v86, %v84
    %v93 = vpack.c.b16 %v87, %v85
    %v94 = vpack.c.b16 %v90, %v88
    %v95 = vpack.c.b16 %v91, %v89
    %v122 = vunpack.c.l.b16 %v52
    %v123 = vunpack.c.l.b16 %v53
    %v124 = vunpack.c.l.b16 %v54
    %v125 = vunpack.c.l.b16 %v55
    %v126 = vunpack.c.l.b16 %v56
    %v127 = vunpack.c.l.b16 %v57
    %v128 = vunpack.c.l.b16 %v58
    %v129 = vunpack.c.l.b16 %v59
    %v130 = vunpack.c.l.b16 %v60
    %v131 = vunpack.c.l.b16 %v61
    %v132 = vunpack.c.l.b16 %v62
    %v133 = vunpack.c.l.b16 %v63
    %v134 = vunpack.c.l.b16 %v64
    %v135 = vunpack.c.l.b16 %v65
    %v136 = vunpack.c.l.b16 %v66
    %v137 = vunpack.c.l.b16 %v67
    %v138 = vunpack.c.l.b16 %v68
    %v139 = vunpack.c.l.b16 %v69
    %v140 = vunpack.c.l.b16 %v70
    %v141 = vunpack.c.l.b16 %v71
    %v142 = vunpack.c.l.b16 %v72
    %v143 = vunpack.c.l.b16 %v73
    %v144 = vunpack.c.l.b16 %v74
    %v145 = vunpack.c.l.b16 %v75
    %v146 = vpack.c.b16 %v123, %v122
    %v147 = vpack.c.b16 %v125, %v124
    %v148 = vpack.c.b16 %v127, %v126
    %v149 = vpack.c.b16 %v129, %v128
    %v150 = vpack.c.b16 %v131, %v130
    %v151 = vpack.c.b16 %v133, %v132
    %v152 = vpack.c.b16 %v135, %v134
    %v153 = vpack.c.b16 %v137, %v136
    %v154 = vpack.c.b16 %v139, %v138
    %v155 = vpack.c.b16 %v141, %v140
    %v156 = vpack.c.b16 %v143, %v142
    %v157 = vpack.c.b16 %v145, %v144
    %vm170 = vcmask 523264
    %v172 = vsel %vm170, %v93, 0
    %v175 = vsel %vm170, %v95, 0
    %177 = vmatpush.bf16.msra.mxu0 %v153
    %178 = vmatpush.bf16.msra.mxu0 %v152
    %179 = vmatpush.bf16.msra.mxu0 %v151
    %180 = vmatpush.bf16.msra.mxu0 %v150
    %181 = vmatpush.bf16.msra.mxu0 %v149
    %182 = vmatpush.bf16.msra.mxu0 %v148
    %183 = vmatpush.bf16.msra.mxu0 %v147
    %184 = vmatpush.bf16.msra.mxu0 %v146
    %185 = vmatmul.bf16.gmra.mxu0 %v92
    %v186 = vpop.f32.mrf.mxu0
    %v187 = vadd.f32 %v78, %v186
    %v188 = vpop.f32.mrf.mxu0
    %v189 = vadd.f32 %v78, %v188
    %190 = vmatmul.bf16.gmra.mxu0 %v94
    %v191 = vpop.f32.mrf.mxu0
    %v192 = vadd.f32 %v78, %v191
    %v193 = vpop.f32.mrf.mxu0
    %v194 = vadd.f32 %v78, %v193
    %195 = vdwg.mxu0
    %196 = vmatpush.bf16.msra.mxu0 0
    %197 = vmatpush.bf16.msra.mxu0 0
    %198 = vmatpush.bf16.msra.mxu0 0
    %199 = vmatpush.bf16.msra.mxu0 0
    %200 = vmatpush.bf16.msra.mxu0 %v157
    %201 = vmatpush.bf16.msra.mxu0 %v156
    %202 = vmatpush.bf16.msra.mxu0 %v155
    %203 = vmatpush.bf16.msra.mxu0 %v154
    %204 = vmatmul.bf16.gmra.mxu0 %v172
    %v205 = vpop.f32.mrf.mxu0
    %v206 = vadd.f32 %v187, %v205
    %v207 = vpop.f32.mrf.mxu0
    %v208 = vadd.f32 %v189, %v207
    %209 = vmatmul.bf16.gmra.mxu0 %v175
    %v210 = vpop.f32.mrf.mxu0
    %v211 = vadd.f32 %v192, %v210
    %v212 = vpop.f32.mrf.mxu0
    %v213 = vadd.f32 %v194, %v212
    %214 = vdwg.mxu0
    %215 = vst [vmem:[#allocation7] sm:$0xff] %v206
    %216 = vst [vmem:[#allocation7 + $0x8] sm:$0xff] %v208
    %217 = vst [vmem:[#allocation7 + $0x10] sm:$0xff] %v211
    %218 = vst [vmem:[#allocation7 + $0x18] sm:$0xff] %v213
    // Predicated region
    $region22: #{tpu_custom_call.1} parent=1 // pred_check
      _
    $region23: #{tpu_custom_call.1} parent=1 // pred_check_branch
      %220 = sbr.rel (0) target = $region25
    $region24: #{tpu_custom_call.1} parent=1 // pred_region
      %222 = vsyncadd [#allocation4], 0
      %s223 = sshll.u32 [#allocation7], 4
      %s224 = int_to_ptr.vmem [resolvable:$true] %s223
      %s225 = sshll.u32 %s3, 4
      %s226 = int_to_ptr.hbm [resolvable:$true] %s225
      %231 = dma.vmem_to_hbm [thread:$0]  %s224, 512, %s226, [#allocation4], 128, 128, 8
    $region25: #{tpu_custom_call.1} parent=1 // pred_fallthru
      _
    // Predicated region
    $region26: #{tpu_custom_call.1} parent=1 // pred_check
      _
    $region27: #{tpu_custom_call.1} parent=1 // pred_check_branch
      %233 = sbr.rel (0) target = $region29
    $region28: #{tpu_custom_call.1} parent=1 // pred_region
      %235 = dma.done [#allocation4], 512
    $region29: #{tpu_custom_call.1} parent=1 // pred_fallthru
      _
    %236 = vsyncpa [#allocation3], 1
    %237 = vsyncpa [#allocation6], 1
    %238 = vsyncpa [#allocation4], 1

</llo_original>
